<compile_context>
chip_gen: v7x
topology: tpu7x:2x2x1
jax: 0.10.0
libtpu: 0.0.40
codegen_flags: <defaults>
</compile_context>

<pallas_src>
import functools

import jax
import jax.numpy as jnp
from jax.experimental import pallas as pl
from jax.experimental.pallas import tpu as pltpu


def _rnn_kernel(x_ref, gamma_ref, beta_ref, wih_ref, whh_ref, b_ref,
                wfc_ref, bfc_ref,
                out_ref, *, batch, seq_len):
    """Single invocation: hoisted LN + input projection, then the LSTM recurrence.

    x_ref is the time-major flat slab (T*B, I) (row = t*B + b).
    out_ref is the packed, lane-dense (B, OUT_W) slab [h_n | c_n | pred | 0-pad].
    """
    B = batch
    T = seq_len
    H = whh_ref.shape[0]
    O = wfc_ref.shape[1]

    # ---- Hoisted LayerNorm (f32) over the feature dim for ALL (t, b) rows ----
    # eps = 1e-5 (PyTorch default).  I = 4 lanes only: the tiny cross-lane
    # reduction is XLU work off the MXU/EUP critical path - fine at this size.
    x = x_ref[...].astype(jnp.float32)
    mu = jnp.mean(x, axis=-1, keepdims=True)
    var = jnp.mean((x - mu) ** 2, axis=-1, keepdims=True)
    xn = (x - mu) * jax.lax.rsqrt(var + 1e-5)
    xn = xn * gamma_ref[...] + beta_ref[...]                      # (T*B, I) f32

    # ---- Hoisted input projection: one bf16 MXU push for all timesteps, f32 acc,
    #      bias folded.  Kept as a VALUE (no VMEM scratch round-trip). ----
    bias = b_ref[...]                                             # (1, 4H) f32
    xw = jnp.dot(xn.astype(jnp.bfloat16), wih_ref[...],
                 preferred_element_type=jnp.float32) + bias       # (T*B, 4H) f32

    whh = whh_ref[...]                                            # (H, 4H) bf16, resident

    # ---- Sequential LSTM recurrence (PyTorch gate order: i, f, g, o) ----
    # Fully static Python unroll; static sublane-aligned row slices of xw.
    h = jnp.zeros((B, H), jnp.float32)
    c = jnp.zeros((B, H), jnp.float32)
    for t in range(T):
        gates = xw[t * B:(t + 1) * B, :] + jnp.dot(
            h.astype(jnp.bfloat16), whh,
            preferred_element_type=jnp.float32)                   # (B, 4H) f32
        sig = jax.nn.sigmoid(gates)                               # full-vreg EUP work
        th = jnp.tanh(gates)
        i_g = sig[:, 0:H]
        f_g = sig[:, H:2 * H]
        g_g = th[:, 2 * H:3 * H]
        o_g = sig[:, 3 * H:4 * H]
        c = f_g * c + i_g * g_g
        h = o_g * jnp.tanh(c)

    # ---- FC head on the last hidden state (f32) ----
    pred = jnp.dot(h, wfc_ref[...],
                   preferred_element_type=jnp.float32) + bfc_ref[...]   # (B, O)

    # ---- Pack [h | c | pred | zero-pad] into one lane-dense block: one store,
    #      one writeback DMA. ----
    pad_w = out_ref.shape[1] - (2 * H + O)
    pieces = [h, c, pred]
    if pad_w > 0:
        pieces.append(jnp.zeros((B, pad_w), jnp.float32))
    out_ref[...] = jnp.concatenate(pieces, axis=-1).astype(out_ref.dtype)


@jax.jit
def autoregressive_rnn_forward(x, gamma, beta, w_ih_t, w_hh_t, bias, w_fc_t, b_fc):
    """x: (B, T, I). Returns (pred (B, O), (h_n (1, B, H), c_n (1, B, H)))."""
    B, T, I = x.shape
    H = w_hh_t.shape[0]
    O = w_fc_t.shape[1]
    OUT_W = max(128, -(-(2 * H + O) // 128) * 128)        # lane-dense packed width

    # Time-major flat slab (row = t*B + b); layout plumbing stays in XLA.
    x_tm = jnp.swapaxes(x, 0, 1).reshape(T * B, I)

    # bf16 MXU operands (f32 accumulation inside the kernel); halves the weight
    # DMA / VMEM footprint and the MXU push cycles per step.
    w_ih_bf = w_ih_t.astype(jnp.bfloat16)
    w_hh_bf = w_hh_t.astype(jnp.bfloat16)

    kernel = functools.partial(_rnn_kernel, batch=B, seq_len=T)

    grid_spec = pltpu.PrefetchScalarGridSpec(
        num_scalar_prefetch=0,
        grid=(1,),                                        # whole recurrence in one invocation
        in_specs=[
            pl.BlockSpec((T * B, I), lambda i: (0, 0)),   # full x slab (time-major)
            pl.BlockSpec((1, I), lambda i: (0, 0)),       # LayerNorm gamma
            pl.BlockSpec((1, I), lambda i: (0, 0)),       # LayerNorm beta
            pl.BlockSpec((I, 4 * H), lambda i: (0, 0)),   # W_ih^T  (bf16)
            pl.BlockSpec((H, 4 * H), lambda i: (0, 0)),   # W_hh^T  (bf16)
            pl.BlockSpec((1, 4 * H), lambda i: (0, 0)),   # b_ih + b_hh
            pl.BlockSpec((H, O), lambda i: (0, 0)),       # W_fc^T
            pl.BlockSpec((1, O), lambda i: (0, 0)),       # b_fc
        ],
        out_specs=pl.BlockSpec((B, OUT_W), lambda i: (0, 0)),   # packed [h|c|pred|pad]
    )

    packed = pl.pallas_call(
        kernel,
        grid_spec=grid_spec,
        out_shape=jax.ShapeDtypeStruct((B, OUT_W), jnp.float32),
        compiler_params=pltpu.CompilerParams(
            dimension_semantics=("arbitrary",),
            vmem_limit_bytes=32 * 1024 * 1024),
    )(x_tm, gamma, beta, w_ih_bf, w_hh_bf, bias, w_fc_t, b_fc)

    h_n = packed[:, 0:H]
    c_n = packed[:, H:2 * H]
    pred = packed[:, 2 * H:2 * H + O]

    # nn.LSTM returns hidden with a leading num_layers dim.
    return pred, (h_n[None], c_n[None])


def _reference_forward(x, gamma, beta, w_ih_t, w_hh_t, bias, w_fc_t, b_fc):
    """Pure-JAX f32 reference mirroring PyTorch semantics."""
    B, T, I = x.shape
    H = w_hh_t.shape[0]

    mu = jnp.mean(x, axis=-1, keepdims=True)
    var = jnp.mean((x - mu) ** 2, axis=-1, keepdims=True)
    xn = (x - mu) * jax.lax.rsqrt(var + 1e-5) * gamma + beta

    def step(carry, x_t):
        h, c = carry
        gates = x_t @ w_ih_t + h @ w_hh_t + bias[0]
        i_g = jax.nn.sigmoid(gates[:, 0:H])
        f_g = jax.nn.sigmoid(gates[:, H:2 * H])
        g_g = jnp.tanh(gates[:, 2 * H:3 * H])
        o_g = jax.nn.sigmoid(gates[:, 3 * H:4 * H])
        c_new = f_g * c + i_g * g_g
        h_new = o_g * jnp.tanh(c_new)
        return (h_new, c_new), h_new

    h0 = jnp.zeros((B, H), jnp.float32)
    c0 = jnp.zeros((B, H), jnp.float32)
    (h_n, c_n), _ = jax.lax.scan(step, (h0, c0), jnp.swapaxes(xn, 0, 1))
    pred = h_n @ w_fc_t + b_fc[0]
    return pred, (h_n[None], c_n[None])


if __name__ == "__main__":
    # Small shapes consistent with the module's forward:
    #   input_size=4, hidden_size=32, num_layers=1, output_size=1
    B, T, I, H, O = 8, 8, 4, 32, 1

    key = jax.random.PRNGKey(0)
    keys = jax.random.split(key, 8)
    k = 1.0 / jnp.sqrt(H)   # PyTorch LSTM/Linear uniform init scale

    x = jax.random.normal(keys[0], (B, T, I), jnp.float32)

    # LayerNorm params (PyTorch default init: gamma=1, beta=0).
    gamma = jnp.ones((1, I), jnp.float32)
    beta = jnp.zeros((1, I), jnp.float32)

    # LSTM params (stored pre-transposed for the kernel's (x @ W^T) layout).
    w_ih_t = jax.random.uniform(keys[1], (I, 4 * H), jnp.float32, -k, k)
    w_hh_t = jax.random.uniform(keys[2], (H, 4 * H), jnp.float32, -k, k)
    b_ih = jax.random.uniform(keys[3], (4 * H,), jnp.float32, -k, k)
    b_hh = jax.random.uniform(keys[4], (4 * H,), jnp.float32, -k, k)
    bias = (b_ih + b_hh)[None, :]                         # (1, 4H)

    # FC head params.
    w_fc_t = jax.random.uniform(keys[5], (H, O), jnp.float32, -k, k)
    b_fc = jax.random.uniform(keys[6], (O,), jnp.float32, -k, k)[None, :]

    pred, (h_n, c_n) = autoregressive_rnn_forward(
        x, gamma, beta, w_ih_t, w_hh_t, bias, w_fc_t, b_fc)
    jax.block_until_ready(pred)
    jax.block_until_ready(h_n)
    jax.block_until_ready(c_n)

    # Sanity check against a pure-JAX f32 reference.  The kernel uses bf16 MXU
    # operands with f32 accumulation (per perf review), so tolerance is the
    # standard mixed-precision 2e-2 (observed error is typically ~1e-3).
    pred_ref, (h_ref, c_ref) = _reference_forward(
        x, gamma, beta, w_ih_t, w_hh_t, bias, w_fc_t, b_fc)
    assert pred.shape == (B, O) and h_n.shape == (1, B, H) and c_n.shape == (1, B, H)
    assert jnp.allclose(pred, pred_ref, atol=2e-2, rtol=2e-2)
    assert jnp.allclose(h_n, h_ref, atol=2e-2, rtol=2e-2)
    assert jnp.allclose(c_n, c_ref, atol=2e-2, rtol=2e-2)

    print("KERNEL_OK")
</pallas_src>

<mosaic_0001>
module attributes {stable_mosaic.version = 11 : i64} {
  func.func @_rnn_kernel(%arg0: i32, %arg1: memref<64x4xf32, #tpu.memory_space<vmem>>, %arg2: memref<1x4xf32, #tpu.memory_space<vmem>>, %arg3: memref<1x4xf32, #tpu.memory_space<vmem>>, %arg4: memref<4x128xbf16, #tpu.memory_space<vmem>>, %arg5: memref<32x128xbf16, #tpu.memory_space<vmem>>, %arg6: memref<1x128xf32, #tpu.memory_space<vmem>>, %arg7: memref<32x1xf32, #tpu.memory_space<vmem>>, %arg8: memref<1x1xf32, #tpu.memory_space<vmem>>, %arg9: memref<8x128xf32, #tpu.memory_space<vmem>>) attributes {dimension_semantics = [#tpu.dimension_semantics<arbitrary>], iteration_bounds = array<i64: 1>, scalar_prefetch = 0 : i64, scratch_operands = 0 : i64, tpu.core_type = #tpu.core_type<tc>, window_params = [{pipeline_mode = #tpu.pipeline_mode<synchronous>, transform_indices = @transform_0, window_bounds = array<i64: 64, 4>}, {pipeline_mode = #tpu.pipeline_mode<synchronous>, transform_indices = @transform_1, window_bounds = array<i64: 1, 4>}, {pipeline_mode = #tpu.pipeline_mode<synchronous>, transform_indices = @transform_2, window_bounds = array<i64: 1, 4>}, {pipeline_mode = #tpu.pipeline_mode<synchronous>, transform_indices = @transform_3, window_bounds = array<i64: 4, 128>}, {pipeline_mode = #tpu.pipeline_mode<synchronous>, transform_indices = @transform_4, window_bounds = array<i64: 32, 128>}, {pipeline_mode = #tpu.pipeline_mode<synchronous>, transform_indices = @transform_5, window_bounds = array<i64: 1, 128>}, {pipeline_mode = #tpu.pipeline_mode<synchronous>, transform_indices = @transform_6, window_bounds = array<i64: 32, 1>}, {pipeline_mode = #tpu.pipeline_mode<synchronous>, transform_indices = @transform_7, window_bounds = array<i64: 1, 1>}, {pipeline_mode = #tpu.pipeline_mode<synchronous>, transform_indices = @transform_8, window_bounds = array<i64: 8, 128>}]} {
    %c0 = arith.constant 0 : index
    %c0_0 = arith.constant 0 : index
    %0 = vector.load %arg1[%c0, %c0_0] : memref<64x4xf32, #tpu.memory_space<vmem>>, vector<64x4xf32>
    %cst = arith.constant dense<0.000000e+00> : vector<64xf32>
    %1 = vector.multi_reduction <add>, %0, %cst [1] : vector<64x4xf32> to vector<64xf32>
    %2 = vector.shape_cast %1 : vector<64xf32> to vector<64x1xf32>
    %cst_1 = arith.constant 4.000000e+00 : f32
    %3 = vector.broadcast %cst_1 : f32 to vector<64x1xf32>
    %4 = arith.divf %2, %3 : vector<64x1xf32>
    %5 = vector.broadcast %4 : vector<64x1xf32> to vector<64x4xf32>
    %6 = arith.subf %0, %5 : vector<64x4xf32>
    %7 = arith.mulf %6, %6 : vector<64x4xf32>
    %cst_2 = arith.constant dense<0.000000e+00> : vector<64xf32>
    %8 = vector.multi_reduction <add>, %7, %cst_2 [1] : vector<64x4xf32> to vector<64xf32>
    %9 = vector.shape_cast %8 : vector<64xf32> to vector<64x1xf32>
    %cst_3 = arith.constant 4.000000e+00 : f32
    %10 = vector.broadcast %cst_3 : f32 to vector<64x1xf32>
    %11 = arith.divf %9, %10 : vector<64x1xf32>
    %12 = vector.broadcast %4 : vector<64x1xf32> to vector<64x4xf32>
    %13 = arith.subf %0, %12 : vector<64x4xf32>
    %cst_4 = arith.constant 9.99999974E-6 : f32
    %14 = vector.broadcast %cst_4 : f32 to vector<64x1xf32>
    %15 = arith.addf %11, %14 : vector<64x1xf32>
    %16 = math.rsqrt %15 : vector<64x1xf32>
    %17 = vector.broadcast %16 : vector<64x1xf32> to vector<64x4xf32>
    %18 = arith.mulf %13, %17 : vector<64x4xf32>
    %c0_5 = arith.constant 0 : index
    %c0_6 = arith.constant 0 : index
    %19 = vector.load %arg2[%c0_5, %c0_6] : memref<1x4xf32, #tpu.memory_space<vmem>>, vector<1x4xf32>
    %20 = vector.broadcast %19 : vector<1x4xf32> to vector<64x4xf32>
    %21 = arith.mulf %18, %20 : vector<64x4xf32>
    %c0_7 = arith.constant 0 : index
    %c0_8 = arith.constant 0 : index
    %22 = vector.load %arg3[%c0_7, %c0_8] : memref<1x4xf32, #tpu.memory_space<vmem>>, vector<1x4xf32>
    %23 = vector.broadcast %22 : vector<1x4xf32> to vector<64x4xf32>
    %24 = arith.addf %21, %23 : vector<64x4xf32>
    %c0_9 = arith.constant 0 : index
    %c0_10 = arith.constant 0 : index
    %25 = vector.load %arg6[%c0_9, %c0_10] : memref<1x128xf32, #tpu.memory_space<vmem>>, vector<1x128xf32>
    %26 = arith.truncf %24 : vector<64x4xf32> to vector<64x4xbf16>
    %c0_11 = arith.constant 0 : index
    %c0_12 = arith.constant 0 : index
    %27 = vector.load %arg4[%c0_11, %c0_12] : memref<4x128xbf16, #tpu.memory_space<vmem>>, vector<4x128xbf16>
    %cst_13 = arith.constant dense<0.000000e+00> : vector<64x128xf32>
    %28 = tpu.matmul %26, %27, %cst_13 {dimension_numbers = #tpu.dot_dimension_numbers<[1], [0], [0], [1], [0, 0, 1, 1], [], []>} : vector<64x4xbf16>, vector<4x128xbf16>, vector<64x128xf32> -> vector<64x128xf32>
    %29 = vector.broadcast %25 : vector<1x128xf32> to vector<64x128xf32>
    %30 = arith.addf %28, %29 : vector<64x128xf32>
    %c0_14 = arith.constant 0 : index
    %c0_15 = arith.constant 0 : index
    %31 = vector.load %arg5[%c0_14, %c0_15] : memref<32x128xbf16, #tpu.memory_space<vmem>>, vector<32x128xbf16>
    %cst_16 = arith.constant 0.000000e+00 : f32
    %32 = vector.broadcast %cst_16 : f32 to vector<8x32xf32>
    %cst_17 = arith.constant 0.000000e+00 : f32
    %33 = vector.broadcast %cst_17 : f32 to vector<8x32xf32>
    %34 = vector.extract_strided_slice %30 {offsets = [0, 0], sizes = [8, 128], strides = [1, 1]} : vector<64x128xf32> to vector<8x128xf32>
    %35 = arith.truncf %32 : vector<8x32xf32> to vector<8x32xbf16>
    %cst_18 = arith.constant dense<0.000000e+00> : vector<8x128xf32>
    %36 = tpu.matmul %35, %31, %cst_18 {dimension_numbers = #tpu.dot_dimension_numbers<[1], [0], [0], [1], [0, 0, 1, 1], [], []>} : vector<8x32xbf16>, vector<32x128xbf16>, vector<8x128xf32> -> vector<8x128xf32>
    %37 = arith.addf %34, %36 : vector<8x128xf32>
    %38 = arith.negf %37 : vector<8x128xf32>
    %39 = math.exp %38 : vector<8x128xf32>
    %cst_19 = arith.constant 1.000000e+00 : f32
    %40 = vector.broadcast %cst_19 : f32 to vector<8x128xf32>
    %41 = arith.addf %40, %39 : vector<8x128xf32>
    %42 = arith.divf %40, %41 : vector<8x128xf32>
    %43 = math.tanh %37 : vector<8x128xf32>
    %44 = vector.extract_strided_slice %42 {offsets = [0, 0], sizes = [8, 32], strides = [1, 1]} : vector<8x128xf32> to vector<8x32xf32>
    %45 = vector.extract_strided_slice %42 {offsets = [0, 32], sizes = [8, 32], strides = [1, 1]} : vector<8x128xf32> to vector<8x32xf32>
    %46 = vector.extract_strided_slice %43 {offsets = [0, 64], sizes = [8, 32], strides = [1, 1]} : vector<8x128xf32> to vector<8x32xf32>
    %47 = vector.extract_strided_slice %42 {offsets = [0, 96], sizes = [8, 32], strides = [1, 1]} : vector<8x128xf32> to vector<8x32xf32>
    %48 = arith.mulf %45, %33 : vector<8x32xf32>
    %49 = arith.mulf %44, %46 : vector<8x32xf32>
    %50 = arith.addf %48, %49 : vector<8x32xf32>
    %51 = math.tanh %50 : vector<8x32xf32>
    %52 = arith.mulf %47, %51 : vector<8x32xf32>
    %53 = vector.extract_strided_slice %30 {offsets = [8, 0], sizes = [8, 128], strides = [1, 1]} : vector<64x128xf32> to vector<8x128xf32>
    %54 = arith.truncf %52 : vector<8x32xf32> to vector<8x32xbf16>
    %cst_20 = arith.constant dense<0.000000e+00> : vector<8x128xf32>
    %55 = tpu.matmul %54, %31, %cst_20 {dimension_numbers = #tpu.dot_dimension_numbers<[1], [0], [0], [1], [0, 0, 1, 1], [], []>} : vector<8x32xbf16>, vector<32x128xbf16>, vector<8x128xf32> -> vector<8x128xf32>
    %56 = arith.addf %53, %55 : vector<8x128xf32>
    %57 = arith.negf %56 : vector<8x128xf32>
    %58 = math.exp %57 : vector<8x128xf32>
    %cst_21 = arith.constant 1.000000e+00 : f32
    %59 = vector.broadcast %cst_21 : f32 to vector<8x128xf32>
    %60 = arith.addf %59, %58 : vector<8x128xf32>
    %61 = arith.divf %59, %60 : vector<8x128xf32>
    %62 = math.tanh %56 : vector<8x128xf32>
    %63 = vector.extract_strided_slice %61 {offsets = [0, 0], sizes = [8, 32], strides = [1, 1]} : vector<8x128xf32> to vector<8x32xf32>
    %64 = vector.extract_strided_slice %61 {offsets = [0, 32], sizes = [8, 32], strides = [1, 1]} : vector<8x128xf32> to vector<8x32xf32>
    %65 = vector.extract_strided_slice %62 {offsets = [0, 64], sizes = [8, 32], strides = [1, 1]} : vector<8x128xf32> to vector<8x32xf32>
    %66 = vector.extract_strided_slice %61 {offsets = [0, 96], sizes = [8, 32], strides = [1, 1]} : vector<8x128xf32> to vector<8x32xf32>
    %67 = arith.mulf %64, %50 : vector<8x32xf32>
    %68 = arith.mulf %63, %65 : vector<8x32xf32>
    %69 = arith.addf %67, %68 : vector<8x32xf32>
    %70 = math.tanh %69 : vector<8x32xf32>
    %71 = arith.mulf %66, %70 : vector<8x32xf32>
    %72 = vector.extract_strided_slice %30 {offsets = [16, 0], sizes = [8, 128], strides = [1, 1]} : vector<64x128xf32> to vector<8x128xf32>
    %73 = arith.truncf %71 : vector<8x32xf32> to vector<8x32xbf16>
    %cst_22 = arith.constant dense<0.000000e+00> : vector<8x128xf32>
    %74 = tpu.matmul %73, %31, %cst_22 {dimension_numbers = #tpu.dot_dimension_numbers<[1], [0], [0], [1], [0, 0, 1, 1], [], []>} : vector<8x32xbf16>, vector<32x128xbf16>, vector<8x128xf32> -> vector<8x128xf32>
    %75 = arith.addf %72, %74 : vector<8x128xf32>
    %76 = arith.negf %75 : vector<8x128xf32>
    %77 = math.exp %76 : vector<8x128xf32>
    %cst_23 = arith.constant 1.000000e+00 : f32
    %78 = vector.broadcast %cst_23 : f32 to vector<8x128xf32>
    %79 = arith.addf %78, %77 : vector<8x128xf32>
    %80 = arith.divf %78, %79 : vector<8x128xf32>
    %81 = math.tanh %75 : vector<8x128xf32>
    %82 = vector.extract_strided_slice %80 {offsets = [0, 0], sizes = [8, 32], strides = [1, 1]} : vector<8x128xf32> to vector<8x32xf32>
    %83 = vector.extract_strided_slice %80 {offsets = [0, 32], sizes = [8, 32], strides = [1, 1]} : vector<8x128xf32> to vector<8x32xf32>
    %84 = vector.extract_strided_slice %81 {offsets = [0, 64], sizes = [8, 32], strides = [1, 1]} : vector<8x128xf32> to vector<8x32xf32>
    %85 = vector.extract_strided_slice %80 {offsets = [0, 96], sizes = [8, 32], strides = [1, 1]} : vector<8x128xf32> to vector<8x32xf32>
    %86 = arith.mulf %83, %69 : vector<8x32xf32>
    %87 = arith.mulf %82, %84 : vector<8x32xf32>
    %88 = arith.addf %86, %87 : vector<8x32xf32>
    %89 = math.tanh %88 : vector<8x32xf32>
    %90 = arith.mulf %85, %89 : vector<8x32xf32>
    %91 = vector.extract_strided_slice %30 {offsets = [24, 0], sizes = [8, 128], strides = [1, 1]} : vector<64x128xf32> to vector<8x128xf32>
    %92 = arith.truncf %90 : vector<8x32xf32> to vector<8x32xbf16>
    %cst_24 = arith.constant dense<0.000000e+00> : vector<8x128xf32>
    %93 = tpu.matmul %92, %31, %cst_24 {dimension_numbers = #tpu.dot_dimension_numbers<[1], [0], [0], [1], [0, 0, 1, 1], [], []>} : vector<8x32xbf16>, vector<32x128xbf16>, vector<8x128xf32> -> vector<8x128xf32>
    %94 = arith.addf %91, %93 : vector<8x128xf32>
    %95 = arith.negf %94 : vector<8x128xf32>
    %96 = math.exp %95 : vector<8x128xf32>
    %cst_25 = arith.constant 1.000000e+00 : f32
    %97 = vector.broadcast %cst_25 : f32 to vector<8x128xf32>
    %98 = arith.addf %97, %96 : vector<8x128xf32>
    %99 = arith.divf %97, %98 : vector<8x128xf32>
    %100 = math.tanh %94 : vector<8x128xf32>
    %101 = vector.extract_strided_slice %99 {offsets = [0, 0], sizes = [8, 32], strides = [1, 1]} : vector<8x128xf32> to vector<8x32xf32>
    %102 = vector.extract_strided_slice %99 {offsets = [0, 32], sizes = [8, 32], strides = [1, 1]} : vector<8x128xf32> to vector<8x32xf32>
    %103 = vector.extract_strided_slice %100 {offsets = [0, 64], sizes = [8, 32], strides = [1, 1]} : vector<8x128xf32> to vector<8x32xf32>
    %104 = vector.extract_strided_slice %99 {offsets = [0, 96], sizes = [8, 32], strides = [1, 1]} : vector<8x128xf32> to vector<8x32xf32>
    %105 = arith.mulf %102, %88 : vector<8x32xf32>
    %106 = arith.mulf %101, %103 : vector<8x32xf32>
    %107 = arith.addf %105, %106 : vector<8x32xf32>
    %108 = math.tanh %107 : vector<8x32xf32>
    %109 = arith.mulf %104, %108 : vector<8x32xf32>
    %110 = vector.extract_strided_slice %30 {offsets = [32, 0], sizes = [8, 128], strides = [1, 1]} : vector<64x128xf32> to vector<8x128xf32>
    %111 = arith.truncf %109 : vector<8x32xf32> to vector<8x32xbf16>
    %cst_26 = arith.constant dense<0.000000e+00> : vector<8x128xf32>
    %112 = tpu.matmul %111, %31, %cst_26 {dimension_numbers = #tpu.dot_dimension_numbers<[1], [0], [0], [1], [0, 0, 1, 1], [], []>} : vector<8x32xbf16>, vector<32x128xbf16>, vector<8x128xf32> -> vector<8x128xf32>
    %113 = arith.addf %110, %112 : vector<8x128xf32>
    %114 = arith.negf %113 : vector<8x128xf32>
    %115 = math.exp %114 : vector<8x128xf32>
    %cst_27 = arith.constant 1.000000e+00 : f32
    %116 = vector.broadcast %cst_27 : f32 to vector<8x128xf32>
    %117 = arith.addf %116, %115 : vector<8x128xf32>
    %118 = arith.divf %116, %117 : vector<8x128xf32>
    %119 = math.tanh %113 : vector<8x128xf32>
    %120 = vector.extract_strided_slice %118 {offsets = [0, 0], sizes = [8, 32], strides = [1, 1]} : vector<8x128xf32> to vector<8x32xf32>
    %121 = vector.extract_strided_slice %118 {offsets = [0, 32], sizes = [8, 32], strides = [1, 1]} : vector<8x128xf32> to vector<8x32xf32>
    %122 = vector.extract_strided_slice %119 {offsets = [0, 64], sizes = [8, 32], strides = [1, 1]} : vector<8x128xf32> to vector<8x32xf32>
    %123 = vector.extract_strided_slice %118 {offsets = [0, 96], sizes = [8, 32], strides = [1, 1]} : vector<8x128xf32> to vector<8x32xf32>
    %124 = arith.mulf %121, %107 : vector<8x32xf32>
    %125 = arith.mulf %120, %122 : vector<8x32xf32>
    %126 = arith.addf %124, %125 : vector<8x32xf32>
    %127 = math.tanh %126 : vector<8x32xf32>
    %128 = arith.mulf %123, %127 : vector<8x32xf32>
    %129 = vector.extract_strided_slice %30 {offsets = [40, 0], sizes = [8, 128], strides = [1, 1]} : vector<64x128xf32> to vector<8x128xf32>
    %130 = arith.truncf %128 : vector<8x32xf32> to vector<8x32xbf16>
    %cst_28 = arith.constant dense<0.000000e+00> : vector<8x128xf32>
    %131 = tpu.matmul %130, %31, %cst_28 {dimension_numbers = #tpu.dot_dimension_numbers<[1], [0], [0], [1], [0, 0, 1, 1], [], []>} : vector<8x32xbf16>, vector<32x128xbf16>, vector<8x128xf32> -> vector<8x128xf32>
    %132 = arith.addf %129, %131 : vector<8x128xf32>
    %133 = arith.negf %132 : vector<8x128xf32>
    %134 = math.exp %133 : vector<8x128xf32>
    %cst_29 = arith.constant 1.000000e+00 : f32
    %135 = vector.broadcast %cst_29 : f32 to vector<8x128xf32>
    %136 = arith.addf %135, %134 : vector<8x128xf32>
    %137 = arith.divf %135, %136 : vector<8x128xf32>
    %138 = math.tanh %132 : vector<8x128xf32>
    %139 = vector.extract_strided_slice %137 {offsets = [0, 0], sizes = [8, 32], strides = [1, 1]} : vector<8x128xf32> to vector<8x32xf32>
    %140 = vector.extract_strided_slice %137 {offsets = [0, 32], sizes = [8, 32], strides = [1, 1]} : vector<8x128xf32> to vector<8x32xf32>
    %141 = vector.extract_strided_slice %138 {offsets = [0, 64], sizes = [8, 32], strides = [1, 1]} : vector<8x128xf32> to vector<8x32xf32>
    %142 = vector.extract_strided_slice %137 {offsets = [0, 96], sizes = [8, 32], strides = [1, 1]} : vector<8x128xf32> to vector<8x32xf32>
    %143 = arith.mulf %140, %126 : vector<8x32xf32>
    %144 = arith.mulf %139, %141 : vector<8x32xf32>
    %145 = arith.addf %143, %144 : vector<8x32xf32>
    %146 = math.tanh %145 : vector<8x32xf32>
    %147 = arith.mulf %142, %146 : vector<8x32xf32>
    %148 = vector.extract_strided_slice %30 {offsets = [48, 0], sizes = [8, 128], strides = [1, 1]} : vector<64x128xf32> to vector<8x128xf32>
    %149 = arith.truncf %147 : vector<8x32xf32> to vector<8x32xbf16>
    %cst_30 = arith.constant dense<0.000000e+00> : vector<8x128xf32>
    %150 = tpu.matmul %149, %31, %cst_30 {dimension_numbers = #tpu.dot_dimension_numbers<[1], [0], [0], [1], [0, 0, 1, 1], [], []>} : vector<8x32xbf16>, vector<32x128xbf16>, vector<8x128xf32> -> vector<8x128xf32>
    %151 = arith.addf %148, %150 : vector<8x128xf32>
    %152 = arith.negf %151 : vector<8x128xf32>
    %153 = math.exp %152 : vector<8x128xf32>
    %cst_31 = arith.constant 1.000000e+00 : f32
    %154 = vector.broadcast %cst_31 : f32 to vector<8x128xf32>
    %155 = arith.addf %154, %153 : vector<8x128xf32>
    %156 = arith.divf %154, %155 : vector<8x128xf32>
    %157 = math.tanh %151 : vector<8x128xf32>
    %158 = vector.extract_strided_slice %156 {offsets = [0, 0], sizes = [8, 32], strides = [1, 1]} : vector<8x128xf32> to vector<8x32xf32>
    %159 = vector.extract_strided_slice %156 {offsets = [0, 32], sizes = [8, 32], strides = [1, 1]} : vector<8x128xf32> to vector<8x32xf32>
    %160 = vector.extract_strided_slice %157 {offsets = [0, 64], sizes = [8, 32], strides = [1, 1]} : vector<8x128xf32> to vector<8x32xf32>
    %161 = vector.extract_strided_slice %156 {offsets = [0, 96], sizes = [8, 32], strides = [1, 1]} : vector<8x128xf32> to vector<8x32xf32>
    %162 = arith.mulf %159, %145 : vector<8x32xf32>
    %163 = arith.mulf %158, %160 : vector<8x32xf32>
    %164 = arith.addf %162, %163 : vector<8x32xf32>
    %165 = math.tanh %164 : vector<8x32xf32>
    %166 = arith.mulf %161, %165 : vector<8x32xf32>
    %167 = vector.extract_strided_slice %30 {offsets = [56, 0], sizes = [8, 128], strides = [1, 1]} : vector<64x128xf32> to vector<8x128xf32>
    %168 = arith.truncf %166 : vector<8x32xf32> to vector<8x32xbf16>
    %cst_32 = arith.constant dense<0.000000e+00> : vector<8x128xf32>
    %169 = tpu.matmul %168, %31, %cst_32 {dimension_numbers = #tpu.dot_dimension_numbers<[1], [0], [0], [1], [0, 0, 1, 1], [], []>} : vector<8x32xbf16>, vector<32x128xbf16>, vector<8x128xf32> -> vector<8x128xf32>
    %170 = arith.addf %167, %169 : vector<8x128xf32>
    %171 = arith.negf %170 : vector<8x128xf32>
    %172 = math.exp %171 : vector<8x128xf32>
    %cst_33 = arith.constant 1.000000e+00 : f32
    %173 = vector.broadcast %cst_33 : f32 to vector<8x128xf32>
    %174 = arith.addf %173, %172 : vector<8x128xf32>
    %175 = arith.divf %173, %174 : vector<8x128xf32>
    %176 = math.tanh %170 : vector<8x128xf32>
    %177 = vector.extract_strided_slice %175 {offsets = [0, 0], sizes = [8, 32], strides = [1, 1]} : vector<8x128xf32> to vector<8x32xf32>
    %178 = vector.extract_strided_slice %175 {offsets = [0, 32], sizes = [8, 32], strides = [1, 1]} : vector<8x128xf32> to vector<8x32xf32>
    %179 = vector.extract_strided_slice %176 {offsets = [0, 64], sizes = [8, 32], strides = [1, 1]} : vector<8x128xf32> to vector<8x32xf32>
    %180 = vector.extract_strided_slice %175 {offsets = [0, 96], sizes = [8, 32], strides = [1, 1]} : vector<8x128xf32> to vector<8x32xf32>
    %181 = arith.mulf %178, %164 : vector<8x32xf32>
    %182 = arith.mulf %177, %179 : vector<8x32xf32>
    %183 = arith.addf %181, %182 : vector<8x32xf32>
    %184 = math.tanh %183 : vector<8x32xf32>
    %185 = arith.mulf %180, %184 : vector<8x32xf32>
    %c0_34 = arith.constant 0 : index
    %c0_35 = arith.constant 0 : index
    %186 = vector.load %arg7[%c0_34, %c0_35] : memref<32x1xf32, #tpu.memory_space<vmem>>, vector<32x1xf32>
    %cst_36 = arith.constant dense<0.000000e+00> : vector<8x1xf32>
    %187 = tpu.matmul %185, %186, %cst_36 {dimension_numbers = #tpu.dot_dimension_numbers<[1], [0], [0], [1], [0, 0, 1, 1], [], []>} : vector<8x32xf32>, vector<32x1xf32>, vector<8x1xf32> -> vector<8x1xf32>
    %c0_37 = arith.constant 0 : index
    %c0_38 = arith.constant 0 : index
    %188 = vector.load %arg8[%c0_37, %c0_38] : memref<1x1xf32, #tpu.memory_space<vmem>>, vector<1x1xf32>
    %189 = vector.broadcast %188 : vector<1x1xf32> to vector<8x1xf32>
    %190 = arith.addf %187, %189 : vector<8x1xf32>
    %cst_39 = arith.constant 0.000000e+00 : f32
    %191 = vector.broadcast %cst_39 : f32 to vector<8x63xf32>
    %192 = tpu.concatenate %185, %183, %190, %191 in 1 : vector<8x32xf32>, vector<8x32xf32>, vector<8x1xf32>, vector<8x63xf32> -> vector<8x128xf32>
    %c0_40 = arith.constant 0 : index
    %c0_41 = arith.constant 0 : index
    %193 = vector.load %arg9[%c0_40, %c0_41] : memref<8x128xf32, #tpu.memory_space<vmem>>, vector<8x128xf32>
    tpu.vector_store %arg9[%c0_40, %c0_41], %192 {strides = array<i32>} : memref<8x128xf32, #tpu.memory_space<vmem>>, vector<8x128xf32>,
    return
  }
  func.func @transform_0(%arg0: i32) -> (i32, i32) {
    %c0_i32 = arith.constant 0 : i32
    %c0_i32_0 = arith.constant 0 : i32
    %c0_i32_1 = arith.constant 0 : i32
    return %c0_i32, %c0_i32_0 : i32, i32
  }
  func.func @transform_1(%arg0: i32) -> (i32, i32) {
    %c0_i32 = arith.constant 0 : i32
    %c0_i32_0 = arith.constant 0 : i32
    %c0_i32_1 = arith.constant 0 : i32
    return %c0_i32, %c0_i32_0 : i32, i32
  }
  func.func @transform_2(%arg0: i32) -> (i32, i32) {
    %c0_i32 = arith.constant 0 : i32
    %c0_i32_0 = arith.constant 0 : i32
    %c0_i32_1 = arith.constant 0 : i32
    return %c0_i32, %c0_i32_0 : i32, i32
  }
  func.func @transform_3(%arg0: i32) -> (i32, i32) {
    %c0_i32 = arith.constant 0 : i32
    %c0_i32_0 = arith.constant 0 : i32
    %c0_i32_1 = arith.constant 0 : i32
    return %c0_i32, %c0_i32_0 : i32, i32
  }
  func.func @transform_4(%arg0: i32) -> (i32, i32) {
    %c0_i32 = arith.constant 0 : i32
    %c0_i32_0 = arith.constant 0 : i32
    %c0_i32_1 = arith.constant 0 : i32
    return %c0_i32, %c0_i32_0 : i32, i32
  }
  func.func @transform_5(%arg0: i32) -> (i32, i32) {
    %c0_i32 = arith.constant 0 : i32
    %c0_i32_0 = arith.constant 0 : i32
    %c0_i32_1 = arith.constant 0 : i32
    return %c0_i32, %c0_i32_0 : i32, i32
  }
  func.func @transform_6(%arg0: i32) -> (i32, i32) {
    %c0_i32 = arith.constant 0 : i32
    %c0_i32_0 = arith.constant 0 : i32
    %c0_i32_1 = arith.constant 0 : i32
    return %c0_i32, %c0_i32_0 : i32, i32
  }
  func.func @transform_7(%arg0: i32) -> (i32, i32) {
    %c0_i32 = arith.constant 0 : i32
    %c0_i32_0 = arith.constant 0 : i32
    %c0_i32_1 = arith.constant 0 : i32
    return %c0_i32, %c0_i32_0 : i32, i32
  }
  func.func @transform_8(%arg0: i32) -> (i32, i32) {
    %c0_i32 = arith.constant 0 : i32
    %c0_i32_0 = arith.constant 0 : i32
    %c0_i32_1 = arith.constant 0 : i32
    return %c0_i32, %c0_i32_0 : i32, i32
  }
}

</mosaic_0001>

<llo_original>
// kernel: autoregressive_rnn_forward.1
$region0: #{autoregressive_rnn_forward.1}
  #allocation0 [shape = 'u32[]', space=smem, size = 0x4, offset = 0x4, fixed_abs, tag = 'smem constant byte address 0x4 - core index']
  #allocation1 [shape = 'u32[144,128]{1,0:T(1,128)}', space=vmem, size = 0x12000, scoped, tag = 'internal scratch']
  #allocation2 [shape = 'f32[1,1]{1,0:T(1,128)S(1)}', space=vmem, size = 0x200, scoped, tag = 'scoped memory for autoregressive_rnn_forward.1']
  %s0 = inlined_call_operand.vmem [shape: f32[64,4], index: 0, kind: input, shape index: {}]
  %s1 = inlined_call_operand.vmem [shape: f32[1,4], index: 1, kind: input, shape index: {}]
  %s2 = inlined_call_operand.vmem [shape: f32[1,4], index: 2, kind: input, shape index: {}]
  %s3 = inlined_call_operand.vmem [shape: bf16[4,128], index: 3, kind: input, shape index: {}]
  %s4 = inlined_call_operand.vmem [shape: bf16[32,128], index: 4, kind: input, shape index: {}]
  %s5 = inlined_call_operand.vmem [shape: f32[1,128], index: 5, kind: input, shape index: {}]
  %s6 = inlined_call_operand.vmem [shape: f32[32,1], index: 6, kind: input, shape index: {}]
  %s7 = inlined_call_operand.<no memory space> [shape: f32[1,1], index: 7, kind: input, shape index: {}]
  %s8 = inlined_call_operand.vmem [shape: f32[8,128], index: 8, kind: output, shape index: {}]
  %s9 = sld [smem:[#allocation0]]
  $region42: #{autoregressive_rnn_forward.1} parent=0
    _
  %s11 = ssub.s32 1, %s9
  %s12 = scalar_select 0, %s11, %s9
  %v13 = vstv %s7
  %14 = vst [vmem:[#allocation2] sm:$0x1] %v13
  // Predicated region
  $region2: #{autoregressive_rnn_forward.1} parent=0 // pred_check
    _
  $region3: #{autoregressive_rnn_forward.1} parent=0 // pred_check_branch
    %16 = sbr.rel (0) target = $region5
  $region4: #{autoregressive_rnn_forward.1} parent=0 // pred_region
    _
  $region5: #{autoregressive_rnn_forward.1} parent=0 // pred_fallthru
    _
  // Predicated region
  $region6: #{autoregressive_rnn_forward.1} parent=0 // pred_check
    _
  $region7: #{autoregressive_rnn_forward.1} parent=0 // pred_check_branch
    %18 = sbr.rel (0) target = $region9
  $region8: #{autoregressive_rnn_forward.1} parent=0 // pred_region
    _
  $region9: #{autoregressive_rnn_forward.1} parent=0 // pred_fallthru
    _
  // Predicated region
  $region10: #{autoregressive_rnn_forward.1} parent=0 // pred_check
    _
  $region11: #{autoregressive_rnn_forward.1} parent=0 // pred_check_branch
    %20 = sbr.rel (0) target = $region13
  $region12: #{autoregressive_rnn_forward.1} parent=0 // pred_region
    _
  $region13: #{autoregressive_rnn_forward.1} parent=0 // pred_fallthru
    _
  // Predicated region
  $region14: #{autoregressive_rnn_forward.1} parent=0 // pred_check
    _
  $region15: #{autoregressive_rnn_forward.1} parent=0 // pred_check_branch
    %22 = sbr.rel (0) target = $region17
  $region16: #{autoregressive_rnn_forward.1} parent=0 // pred_region
    _
  $region17: #{autoregressive_rnn_forward.1} parent=0 // pred_fallthru
    _
  // Predicated region
  $region18: #{autoregressive_rnn_forward.1} parent=0 // pred_check
    _
  $region19: #{autoregressive_rnn_forward.1} parent=0 // pred_check_branch
    %24 = sbr.rel (0) target = $region21
  $region20: #{autoregressive_rnn_forward.1} parent=0 // pred_region
    _
  $region21: #{autoregressive_rnn_forward.1} parent=0 // pred_fallthru
    _
  // Predicated region
  $region22: #{autoregressive_rnn_forward.1} parent=0 // pred_check
    _
  $region23: #{autoregressive_rnn_forward.1} parent=0 // pred_check_branch
    %26 = sbr.rel (0) target = $region25
  $region24: #{autoregressive_rnn_forward.1} parent=0 // pred_region
    _
  $region25: #{autoregressive_rnn_forward.1} parent=0 // pred_fallthru
    _
  // Predicated region
  $region26: #{autoregressive_rnn_forward.1} parent=0 // pred_check
    _
  $region27: #{autoregressive_rnn_forward.1} parent=0 // pred_check_branch
    %28 = sbr.rel (0) target = $region29
  $region28: #{autoregressive_rnn_forward.1} parent=0 // pred_region
    _
  $region29: #{autoregressive_rnn_forward.1} parent=0 // pred_fallthru
    _
  // Predicated region
  $region30: #{autoregressive_rnn_forward.1} parent=0 // pred_check
    _
  $region31: #{autoregressive_rnn_forward.1} parent=0 // pred_check_branch
    %30 = sbr.rel (0) target = $region33
  $region32: #{autoregressive_rnn_forward.1} parent=0 // pred_region
    _
  $region33: #{autoregressive_rnn_forward.1} parent=0 // pred_fallthru
    _
  %v32 = vld [vmem:[%s0] sm:$0xff]
  %v33 = vld [vmem:[%s0 + $0x8] sm:$0xff]
  %v34 = vld [vmem:[%s0 + $0x10] sm:$0xff]
  %v35 = vld [vmem:[%s0 + $0x18] sm:$0xff]
  %v36 = vld [vmem:[%s0 + $0x20] sm:$0xff]
  %v37 = vld [vmem:[%s0 + $0x28] sm:$0xff]
  %v38 = vld [vmem:[%s0 + $0x30] sm:$0xff]
  %v39 = vld [vmem:[%s0 + $0x38] sm:$0xff]
  %vm40 = vcmask 31744
  %v41 = vsel %vm40, %v32, 0.0
  %42 = vadd.xlane.f32.xlu0 %v41
  %v43 = vpop.xlane.xlu0 %42
  %v44 = vsel %vm40, %v33, 0.0
  %45 = vadd.xlane.f32.xlu0 %v44
  %v46 = vpop.xlane.xlu0 %45
  %v47 = vsel %vm40, %v34, 0.0
  %48 = vadd.xlane.f32.xlu0 %v47
  %v49 = vpop.xlane.xlu0 %48
  %v50 = vsel %vm40, %v35, 0.0
  %51 = vadd.xlane.f32.xlu0 %v50
  %v52 = vpop.xlane.xlu0 %51
  %v53 = vsel %vm40, %v36, 0.0
  %54 = vadd.xlane.f32.xlu0 %v53
  %v55 = vpop.xlane.xlu0 %54
  %v56 = vsel %vm40, %v37, 0.0
  %57 = vadd.xlane.f32.xlu0 %v56
  %v58 = vpop.xlane.xlu0 %57
  %v59 = vsel %vm40, %v38, 0.0
  %60 = vadd.xlane.f32.xlu0 %v59
  %v61 = vpop.xlane.xlu0 %60
  %v62 = vsel %vm40, %v39, 0.0
  %63 = vadd.xlane.f32.xlu0 %v62
  %v64 = vpop.xlane.xlu0 %63
  %v65 = vrcp.pop 4.0
  %v66 = vmul.f32 %v43, %v65
  %v67 = vmul.f32 %v46, %v65
  %v68 = vmul.f32 %v49, %v65
  %v69 = vmul.f32 %v52, %v65
  %v70 = vmul.f32 %v55, %v65
  %v71 = vmul.f32 %v58, %v65
  %v72 = vmul.f32 %v61, %v65
  %v73 = vmul.f32 %v64, %v65
  %v74 = vsub.f32 %v32, %v66
  %v75 = vsub.f32 %v33, %v67
  %v76 = vsub.f32 %v34, %v68
  %v77 = vsub.f32 %v35, %v69
  %v78 = vsub.f32 %v36, %v70
  %v79 = vsub.f32 %v37, %v71
  %v80 = vsub.f32 %v38, %v72
  %v81 = vsub.f32 %v39, %v73
  %v82 = vmul.f32 %v74, %v74
  %v83 = vmul.f32 %v75, %v75
  %v84 = vmul.f32 %v76, %v76
  %v85 = vmul.f32 %v77, %v77
  %v86 = vmul.f32 %v78, %v78
  %v87 = vmul.f32 %v79, %v79
  %v88 = vmul.f32 %v80, %v80
  %v89 = vmul.f32 %v81, %v81
  %v90 = vsel %vm40, %v82, 0.0
  %91 = vadd.xlane.f32.xlu0 %v90
  %v92 = vpop.xlane.xlu0 %91
  %v93 = vsel %vm40, %v83, 0.0
  %94 = vadd.xlane.f32.xlu0 %v93
  %v95 = vpop.xlane.xlu0 %94
  %v96 = vsel %vm40, %v84, 0.0
  %97 = vadd.xlane.f32.xlu0 %v96
  %v98 = vpop.xlane.xlu0 %97
  %v99 = vsel %vm40, %v85, 0.0
  %100 = vadd.xlane.f32.xlu0 %v99
  %v101 = vpop.xlane.xlu0 %100
  %v102 = vsel %vm40, %v86, 0.0
  %103 = vadd.xlane.f32.xlu0 %v102
  %v104 = vpop.xlane.xlu0 %103
  %v105 = vsel %vm40, %v87, 0.0
  %106 = vadd.xlane.f32.xlu0 %v105
  %v107 = vpop.xlane.xlu0 %106
  %v108 = vsel %vm40, %v88, 0.0
  %109 = vadd.xlane.f32.xlu0 %v108
  %v110 = vpop.xlane.xlu0 %109
  %v111 = vsel %vm40, %v89, 0.0
  %112 = vadd.xlane.f32.xlu0 %v111
  %v113 = vpop.xlane.xlu0 %112
  %v114 = vmul.f32 %v92, %v65
  %v115 = vmul.f32 %v95, %v65
  %v116 = vmul.f32 %v98, %v65
  %v117 = vmul.f32 %v101, %v65
  %v118 = vmul.f32 %v104, %v65
  %v119 = vmul.f32 %v107, %v65
  %v120 = vmul.f32 %v110, %v65
  %v121 = vmul.f32 %v113, %v65
  %v122 = vadd.f32 %v114, 1e-05
  %v123 = vadd.f32 %v115, 1e-05
  %v124 = vadd.f32 %v116, 1e-05
  %v125 = vadd.f32 %v117, 1e-05
  %v126 = vadd.f32 %v118, 1e-05
  %v127 = vadd.f32 %v119, 1e-05
  %v128 = vadd.f32 %v120, 1e-05
  %v129 = vadd.f32 %v121, 1e-05
  %v130 = vrsqrt.pop %v122
  %v131 = vrsqrt.pop %v123
  %v132 = vrsqrt.pop %v124
  %v133 = vrsqrt.pop %v125
  %v134 = vrsqrt.pop %v126
  %v135 = vrsqrt.pop %v127
  %v136 = vrsqrt.pop %v128
  %v137 = vrsqrt.pop %v129
  %v138 = vmul.f32 %v74, %v130
  %v139 = vmul.f32 %v75, %v131
  %v140 = vmul.f32 %v76, %v132
  %v141 = vmul.f32 %v77, %v133
  %v142 = vmul.f32 %v78, %v134
  %v143 = vmul.f32 %v79, %v135
  %v144 = vmul.f32 %v80, %v136
  %v145 = vmul.f32 %v81, %v137
  %v146 = vld [vmem:[%s1] sm:$0x1]
  %v148 = vlaneseq
  %v149 = vshrl.u32 %v148, 7
  %v150 = vsub.s32 0, %v149
  %v151 = vrot.slane %v146, %v150
  %v153 = vmul.f32 %v138, %v151
  %v154 = vmul.f32 %v139, %v151
  %v155 = vmul.f32 %v140, %v151
  %v156 = vmul.f32 %v141, %v151
  %v157 = vmul.f32 %v142, %v151
  %v158 = vmul.f32 %v143, %v151
  %v159 = vmul.f32 %v144, %v151
  %v160 = vmul.f32 %v145, %v151
  %v161 = vld [vmem:[%s2] sm:$0x1]
  %v163 = vlaneseq
  %v164 = vshrl.u32 %v163, 7
  %v165 = vsub.s32 0, %v164
  %v166 = vrot.slane %v161, %v165
  %v168 = vadd.f32 %v153, %v166
  %v169 = vadd.f32 %v154, %v166
  %v170 = vadd.f32 %v155, %v166
  %v171 = vadd.f32 %v156, %v166
  %v172 = vadd.f32 %v157, %v166
  %v173 = vadd.f32 %v158, %v166
  %v174 = vadd.f32 %v159, %v166
  %v175 = vadd.f32 %v160, %v166
  %v176 = vld [vmem:[%s5] sm:$0x1]
  %v177 = vpack.c.bf16 %v169, %v168
  %v178 = vpack.c.bf16 %v171, %v170
  %v179 = vpack.c.bf16 %v173, %v172
  %v180 = vpack.c.bf16 %v175, %v174
  %v181 = vld [vmem:[%s3] sm:$0x3]
  %v183 = vlaneseq
  %v184 = vshrl.u32 %v183, 7
  %v185 = vsub.s32 0, %v184
  %v186 = vrot.slane %v176, %v185
  %v189 = vsel %vm40, %v177, 0
  %v192 = vsel %vm40, %v178, 0
  %v195 = vsel %vm40, %v179, 0
  %v198 = vsel %vm40, %v180, 0
  %vm200 = vcmask 1041408
  %v202 = vsel %vm200, %v181, 0
  %204 = vmatprep.subr.bf16.mxu0 0
  %205 = vmatpush1.bf16.msra.mxu0 %v202
  %206 = vmatprep.subr.bf16.mxu0 0
  %207 = vmatpush1.bf16.msra.mxu0 0
  %208 = vmatprep.subr.bf16.mxu0 0
  %209 = vmatpush1.bf16.msra.mxu0 0
  %210 = vmatprep.subr.bf16.mxu0 0
  %211 = vmatpush1.bf16.msra.mxu0 0
  %212 = vmatprep.subr.bf16.mxu0 0
  %213 = vmatpush1.bf16.msra.mxu0 0
  %214 = vmatprep.subr.bf16.mxu0 0
  %215 = vmatpush1.bf16.msra.mxu0 0
  %216 = vmatprep.subr.bf16.mxu0 0
  %217 = vmatpush1.bf16.msra.mxu0 0
  %218 = vmatprep.subr.bf16.mxu0 0
  %219 = vmatpush1.bf16.msra.mxu0 0
  %220 = vmatprep.subr.bf16.mxu0 0
  %221 = vmatpush1.bf16.msra.mxu0 0
  %222 = vmatprep.subr.bf16.mxu0 0
  %223 = vmatpush1.bf16.msra.mxu0 0
  %224 = vmatprep.subr.bf16.mxu0 0
  %225 = vmatpush1.bf16.msra.mxu0 0
  %226 = vmatprep.subr.bf16.mxu0 0
  %227 = vmatpush1.bf16.msra.mxu0 0
  %228 = vmatprep.subr.bf16.mxu0 0
  %229 = vmatpush1.bf16.msra.mxu0 0
  %230 = vmatprep.subr.bf16.mxu0 0
  %231 = vmatpush1.bf16.msra.mxu0 0
  %232 = vmatprep.subr.bf16.mxu0 0
  %233 = vmatpush1.bf16.msra.mxu0 0
  %234 = vmatprep.subr.bf16.mxu0 0
  %235 = vmatpush1.bf16.msra.mxu0 0
  %236 = vmatprep.mubr.bf16.mxu0 0
  %237 = vmatmul.mubr.bf16.gmra.mrb[0].mxu0 %v189
  %v238 = vpop.f32.mrb[0].mxu0
  %v239 = vadd.f32 %v186, %v238
  %v240 = vpop.f32.mrb[0].mxu0
  %v241 = vpop.f32.mrb[0].mxu0
  %v242 = vadd.f32 %v186, %v241
  %v243 = vpop.f32.mrb[0].mxu0
  %244 = vmatprep.mubr.bf16.mxu0 0
  %245 = vmatmul.mubr.bf16.gmra.mrb[0].mxu0 %v192
  %v246 = vpop.f32.mrb[0].mxu0
  %v247 = vadd.f32 %v186, %v246
  %v248 = vpop.f32.mrb[0].mxu0
  %v249 = vpop.f32.mrb[0].mxu0
  %v250 = vadd.f32 %v186, %v249
  %v251 = vpop.f32.mrb[0].mxu0
  %252 = vmatprep.mubr.bf16.mxu0 0
  %253 = vmatmul.mubr.bf16.gmra.mrb[0].mxu0 %v195
  %v254 = vpop.f32.mrb[0].mxu0
  %v255 = vadd.f32 %v186, %v254
  %v256 = vpop.f32.mrb[0].mxu0
  %v257 = vpop.f32.mrb[0].mxu0
  %v258 = vadd.f32 %v186, %v257
  %v259 = vpop.f32.mrb[0].mxu0
  %260 = vmatprep.mubr.bf16.mxu0 0
  %261 = vmatmul.mubr.bf16.gmra.mrb[0].mxu0 %v198
  %v262 = vpop.f32.mrb[0].mxu0
  %v263 = vadd.f32 %v186, %v262
  %v264 = vpop.f32.mrb[0].mxu0
  %v265 = vpop.f32.mrb[0].mxu0
  %v266 = vadd.f32 %v186, %v265
  %v267 = vpop.f32.mrb[0].mxu0
  %268 = vdwg.mxu0
  %v269 = vld [vmem:[%s4] sm:$0xf]
  %v270 = vld [vmem:[%s4 + $0x4] sm:$0xf]
  %v271 = vld [vmem:[%s4 + $0x8] sm:$0xf]
  %v272 = vld [vmem:[%s4 + $0xc] sm:$0xf]
  %v277 = vunpack.c.l.b16 %v269
  %v278 = vunpack.c.l.b16 %v270
  %v279 = vunpack.c.l.b16 %v271
  %v280 = vunpack.c.l.b16 %v272
  %v281 = vpack.c.b16 %v278, %v277
  %v282 = vpack.c.b16 %v280, %v279
  %vm285 = vcmask 261120
  %v287 = vsel %vm285, 0, 0
  %289 = vmatprep.subr.bf16.mxu0 0
  %290 = vmatpush1.bf16.msra.mxu0 %v281
  %291 = vmatprep.subr.bf16.mxu0 0
  %292 = vmatpush1.bf16.msra.mxu0 %v282
  %293 = vmatprep.subr.bf16.mxu0 0
  %294 = vmatpush1.bf16.msra.mxu0 0
  %295 = vmatprep.subr.bf16.mxu0 0
  %296 = vmatpush1.bf16.msra.mxu0 0
  %297 = vmatprep.subr.bf16.mxu0 0
  %298 = vmatpush1.bf16.msra.mxu0 0
  %299 = vmatprep.subr.bf16.mxu0 0
  %300 = vmatpush1.bf16.msra.mxu0 0
  %301 = vmatprep.subr.bf16.mxu0 0
  %302 = vmatpush1.bf16.msra.mxu0 0
  %303 = vmatprep.subr.bf16.mxu0 0
  %304 = vmatpush1.bf16.msra.mxu0 0
  %305 = vmatprep.subr.bf16.mxu0 0
  %306 = vmatpush1.bf16.msra.mxu0 0
  %307 = vmatprep.subr.bf16.mxu0 0
  %308 = vmatpush1.bf16.msra.mxu0 0
  %309 = vmatprep.subr.bf16.mxu0 0
  %310 = vmatpush1.bf16.msra.mxu0 0
  %311 = vmatprep.subr.bf16.mxu0 0
  %312 = vmatpush1.bf16.msra.mxu0 0
  %313 = vmatprep.subr.bf16.mxu0 0
  %314 = vmatpush1.bf16.msra.mxu0 0
  %315 = vmatprep.subr.bf16.mxu0 0
  %316 = vmatpush1.bf16.msra.mxu0 0
  %317 = vmatprep.subr.bf16.mxu0 0
  %318 = vmatpush1.bf16.msra.mxu0 0
  %319 = vmatprep.subr.bf16.mxu0 0
  %320 = vmatpush1.bf16.msra.mxu0 0
  %321 = vmatprep.mubr.bf16.mxu0 0
  %322 = vmatmul.mubr.bf16.gmra.mrb[0].mxu0 %v287
  %v323 = vpop.f32.mrb[0].mxu0
  %v324 = vadd.f32 0.0, %v323
  %v325 = vpop.f32.mrb[0].mxu0
  %v326 = vpop.f32.mrb[0].mxu0
  %v327 = vpop.f32.mrb[0].mxu0
  %328 = vdwg.mxu0
  %v329 = vadd.f32 %v239, %v324
  %v330 = vxor.u32 %v329, 2147483648
  %v331 = vmul.f32 %v330, 1.442695
  %v332 = vpow.pop %v331
  %v333 = vadd.f32 %v332, 1.0
  %v334 = vrcp.pop %v333
  %v335 = vmul.f32 1.0, %v334
  %v336 = vtanh.pop %v329
  %v337 = vmul.f32 %v335, 0.0
  %339 = vrot.lane.b32.xlu0 %v336, 64
  %v340 = vpop.permute.xlu0 %339
  %v342 = vmul.f32 %v335, %v340
  %344 = vrot.lane.b32.xlu0 %v342, 32
  %v345 = vpop.permute.xlu0 %344
  %v347 = vadd.f32 %v337, %v345
  %v348 = vtanh.pop %v347
  %350 = vrot.lane.b32.xlu0 %v348, 64
  %v351 = vpop.permute.xlu0 %350
  %v353 = vmul.f32 %v335, %v351
  %v354 = vpack.c.bf16 %v353, %v353
  %356 = vrot.lane.b32.xlu0 %v354, 32
  %v357 = vpop.permute.xlu0 %356
  %v359 = vsel %vm285, %v357, 0
  %361 = vmatprep.subr.bf16.mxu0 0
  %362 = vmatpush1.bf16.msra.mxu0 %v281
  %363 = vmatprep.subr.bf16.mxu0 0
  %364 = vmatpush1.bf16.msra.mxu0 %v282
  %365 = vmatprep.subr.bf16.mxu0 0
  %366 = vmatpush1.bf16.msra.mxu0 0
  %367 = vmatprep.subr.bf16.mxu0 0
  %368 = vmatpush1.bf16.msra.mxu0 0
  %369 = vmatprep.subr.bf16.mxu0 0
  %370 = vmatpush1.bf16.msra.mxu0 0
  %371 = vmatprep.subr.bf16.mxu0 0
  %372 = vmatpush1.bf16.msra.mxu0 0
  %373 = vmatprep.subr.bf16.mxu0 0
  %374 = vmatpush1.bf16.msra.mxu0 0
  %375 = vmatprep.subr.bf16.mxu0 0
  %376 = vmatpush1.bf16.msra.mxu0 0
  %377 = vmatprep.subr.bf16.mxu0 0
  %378 = vmatpush1.bf16.msra.mxu0 0
  %379 = vmatprep.subr.bf16.mxu0 0
  %380 = vmatpush1.bf16.msra.mxu0 0
  %381 = vmatprep.subr.bf16.mxu0 0
  %382 = vmatpush1.bf16.msra.mxu0 0
  %383 = vmatprep.subr.bf16.mxu0 0
  %384 = vmatpush1.bf16.msra.mxu0 0
  %385 = vmatprep.subr.bf16.mxu0 0
  %386 = vmatpush1.bf16.msra.mxu0 0
  %387 = vmatprep.subr.bf16.mxu0 0
  %388 = vmatpush1.bf16.msra.mxu0 0
  %389 = vmatprep.subr.bf16.mxu0 0
  %390 = vmatpush1.bf16.msra.mxu0 0
  %391 = vmatprep.subr.bf16.mxu0 0
  %392 = vmatpush1.bf16.msra.mxu0 0
  %393 = vmatprep.mubr.bf16.mxu0 0
  %394 = vmatmul.mubr.bf16.gmra.mrb[0].mxu0 %v359
  %v395 = vpop.f32.mrb[0].mxu0
  %v396 = vadd.f32 0.0, %v395
  %v397 = vpop.f32.mrb[0].mxu0
  %v398 = vpop.f32.mrb[0].mxu0
  %v399 = vpop.f32.mrb[0].mxu0
  %400 = vdwg.mxu0
  %v401 = vadd.f32 %v242, %v396
  %v402 = vxor.u32 %v401, 2147483648
  %v403 = vmul.f32 %v402, 1.442695
  %v404 = vpow.pop %v403
  %v405 = vadd.f32 %v404, 1.0
  %v406 = vrcp.pop %v405
  %v407 = vmul.f32 1.0, %v406
  %v408 = vtanh.pop %v401
  %v409 = vmul.f32 %v407, %v347
  %411 = vrot.lane.b32.xlu0 %v408, 64
  %v412 = vpop.permute.xlu0 %411
  %v414 = vmul.f32 %v407, %v412
  %416 = vrot.lane.b32.xlu0 %v414, 32
  %v417 = vpop.permute.xlu0 %416
  %v419 = vadd.f32 %v409, %v417
  %v420 = vtanh.pop %v419
  %422 = vrot.lane.b32.xlu0 %v420, 64
  %v423 = vpop.permute.xlu0 %422
  %v425 = vmul.f32 %v407, %v423
  %v426 = vpack.c.bf16 %v425, %v425
  %428 = vrot.lane.b32.xlu0 %v426, 32
  %v429 = vpop.permute.xlu0 %428
  %v431 = vsel %vm285, %v429, 0
  %433 = vmatprep.subr.bf16.mxu0 0
  %434 = vmatpush1.bf16.msra.mxu0 %v281
  %435 = vmatprep.subr.bf16.mxu0 0
  %436 = vmatpush1.bf16.msra.mxu0 %v282
  %437 = vmatprep.subr.bf16.mxu0 0
  %438 = vmatpush1.bf16.msra.mxu0 0
  %439 = vmatprep.subr.bf16.mxu0 0
  %440 = vmatpush1.bf16.msra.mxu0 0
  %441 = vmatprep.subr.bf16.mxu0 0
  %442 = vmatpush1.bf16.msra.mxu0 0
  %443 = vmatprep.subr.bf16.mxu0 0
  %444 = vmatpush1.bf16.msra.mxu0 0
  %445 = vmatprep.subr.bf16.mxu0 0
  %446 = vmatpush1.bf16.msra.mxu0 0
  %447 = vmatprep.subr.bf16.mxu0 0
  %448 = vmatpush1.bf16.msra.mxu0 0
  %449 = vmatprep.subr.bf16.mxu0 0
  %450 = vmatpush1.bf16.msra.mxu0 0
  %451 = vmatprep.subr.bf16.mxu0 0
  %452 = vmatpush1.bf16.msra.mxu0 0
  %453 = vmatprep.subr.bf16.mxu0 0
  %454 = vmatpush1.bf16.msra.mxu0 0
  %455 = vmatprep.subr.bf16.mxu0 0
  %456 = vmatpush1.bf16.msra.mxu0 0
  %457 = vmatprep.subr.bf16.mxu0 0
  %458 = vmatpush1.bf16.msra.mxu0 0
  %459 = vmatprep.subr.bf16.mxu0 0
  %460 = vmatpush1.bf16.msra.mxu0 0
  %461 = vmatprep.subr.bf16.mxu0 0
  %462 = vmatpush1.bf16.msra.mxu0 0
  %463 = vmatprep.subr.bf16.mxu0 0
  %464 = vmatpush1.bf16.msra.mxu0 0
  %465 = vmatprep.mubr.bf16.mxu0 0
  %466 = vmatmul.mubr.bf16.gmra.mrb[0].mxu0 %v431
  %v467 = vpop.f32.mrb[0].mxu0
  %v468 = vadd.f32 0.0, %v467
  %v469 = vpop.f32.mrb[0].mxu0
  %v470 = vpop.f32.mrb[0].mxu0
  %v471 = vpop.f32.mrb[0].mxu0
  %472 = vdwg.mxu0
  %v473 = vadd.f32 %v247, %v468
  %v474 = vxor.u32 %v473, 2147483648
  %v475 = vmul.f32 %v474, 1.442695
  %v476 = vpow.pop %v475
  %v477 = vadd.f32 %v476, 1.0
  %v478 = vrcp.pop %v477
  %v479 = vmul.f32 1.0, %v478
  %v480 = vtanh.pop %v473
  %v481 = vmul.f32 %v479, %v419
  %483 = vrot.lane.b32.xlu0 %v480, 64
  %v484 = vpop.permute.xlu0 %483
  %v486 = vmul.f32 %v479, %v484
  %488 = vrot.lane.b32.xlu0 %v486, 32
  %v489 = vpop.permute.xlu0 %488
  %v491 = vadd.f32 %v481, %v489
  %v492 = vtanh.pop %v491
  %494 = vrot.lane.b32.xlu0 %v492, 64
  %v495 = vpop.permute.xlu0 %494
  %v497 = vmul.f32 %v479, %v495
  %v498 = vpack.c.bf16 %v497, %v497
  %500 = vrot.lane.b32.xlu0 %v498, 32
  %v501 = vpop.permute.xlu0 %500
  %v503 = vsel %vm285, %v501, 0
  %505 = vmatprep.subr.bf16.mxu0 0
  %506 = vmatpush1.bf16.msra.mxu0 %v281
  %507 = vmatprep.subr.bf16.mxu0 0
  %508 = vmatpush1.bf16.msra.mxu0 %v282
  %509 = vmatprep.subr.bf16.mxu0 0
  %510 = vmatpush1.bf16.msra.mxu0 0
  %511 = vmatprep.subr.bf16.mxu0 0
  %512 = vmatpush1.bf16.msra.mxu0 0
  %513 = vmatprep.subr.bf16.mxu0 0
  %514 = vmatpush1.bf16.msra.mxu0 0
  %515 = vmatprep.subr.bf16.mxu0 0
  %516 = vmatpush1.bf16.msra.mxu0 0
  %517 = vmatprep.subr.bf16.mxu0 0
  %518 = vmatpush1.bf16.msra.mxu0 0
  %519 = vmatprep.subr.bf16.mxu0 0
  %520 = vmatpush1.bf16.msra.mxu0 0
  %521 = vmatprep.subr.bf16.mxu0 0
  %522 = vmatpush1.bf16.msra.mxu0 0
  %523 = vmatprep.subr.bf16.mxu0 0
  %524 = vmatpush1.bf16.msra.mxu0 0
  %525 = vmatprep.subr.bf16.mxu0 0
  %526 = vmatpush1.bf16.msra.mxu0 0
  %527 = vmatprep.subr.bf16.mxu0 0
  %528 = vmatpush1.bf16.msra.mxu0 0
  %529 = vmatprep.subr.bf16.mxu0 0
  %530 = vmatpush1.bf16.msra.mxu0 0
  %531 = vmatprep.subr.bf16.mxu0 0
  %532 = vmatpush1.bf16.msra.mxu0 0
  %533 = vmatprep.subr.bf16.mxu0 0
  %534 = vmatpush1.bf16.msra.mxu0 0
  %535 = vmatprep.subr.bf16.mxu0 0
  %536 = vmatpush1.bf16.msra.mxu0 0
  %537 = vmatprep.mubr.bf16.mxu0 0
  %538 = vmatmul.mubr.bf16.gmra.mrb[0].mxu0 %v503
  %v539 = vpop.f32.mrb[0].mxu0
  %v540 = vadd.f32 0.0, %v539
  %v541 = vpop.f32.mrb[0].mxu0
  %v542 = vpop.f32.mrb[0].mxu0
  %v543 = vpop.f32.mrb[0].mxu0
  %544 = vdwg.mxu0
  %v545 = vadd.f32 %v250, %v540
  %v546 = vxor.u32 %v545, 2147483648
  %v547 = vmul.f32 %v546, 1.442695
  %v548 = vpow.pop %v547
  %v549 = vadd.f32 %v548, 1.0
  %v550 = vrcp.pop %v549
  %v551 = vmul.f32 1.0, %v550
  %v552 = vtanh.pop %v545
  %v553 = vmul.f32 %v551, %v491
  %555 = vrot.lane.b32.xlu0 %v552, 64
  %v556 = vpop.permute.xlu0 %555
  %v558 = vmul.f32 %v551, %v556
  %560 = vrot.lane.b32.xlu0 %v558, 32
  %v561 = vpop.permute.xlu0 %560
  %v563 = vadd.f32 %v553, %v561
  %v564 = vtanh.pop %v563
  %566 = vrot.lane.b32.xlu0 %v564, 64
  %v567 = vpop.permute.xlu0 %566
  %v569 = vmul.f32 %v551, %v567
  %v570 = vpack.c.bf16 %v569, %v569
  %572 = vrot.lane.b32.xlu0 %v570, 32
  %v573 = vpop.permute.xlu0 %572
  %v575 = vsel %vm285, %v573, 0
  %577 = vmatprep.subr.bf16.mxu0 0
  %578 = vmatpush1.bf16.msra.mxu0 %v281
  %579 = vmatprep.subr.bf16.mxu0 0
  %580 = vmatpush1.bf16.msra.mxu0 %v282
  %581 = vmatprep.subr.bf16.mxu0 0
  %582 = vmatpush1.bf16.msra.mxu0 0
  %583 = vmatprep.subr.bf16.mxu0 0
  %584 = vmatpush1.bf16.msra.mxu0 0
  %585 = vmatprep.subr.bf16.mxu0 0
  %586 = vmatpush1.bf16.msra.mxu0 0
  %587 = vmatprep.subr.bf16.mxu0 0
  %588 = vmatpush1.bf16.msra.mxu0 0
  %589 = vmatprep.subr.bf16.mxu0 0
  %590 = vmatpush1.bf16.msra.mxu0 0
  %591 = vmatprep.subr.bf16.mxu0 0
  %592 = vmatpush1.bf16.msra.mxu0 0
  %593 = vmatprep.subr.bf16.mxu0 0
  %594 = vmatpush1.bf16.msra.mxu0 0
  %595 = vmatprep.subr.bf16.mxu0 0
  %596 = vmatpush1.bf16.msra.mxu0 0
  %597 = vmatprep.subr.bf16.mxu0 0
  %598 = vmatpush1.bf16.msra.mxu0 0
  %599 = vmatprep.subr.bf16.mxu0 0
  %600 = vmatpush1.bf16.msra.mxu0 0
  %601 = vmatprep.subr.bf16.mxu0 0
  %602 = vmatpush1.bf16.msra.mxu0 0
  %603 = vmatprep.subr.bf16.mxu0 0
  %604 = vmatpush1.bf16.msra.mxu0 0
  %605 = vmatprep.subr.bf16.mxu0 0
  %606 = vmatpush1.bf16.msra.mxu0 0
  %607 = vmatprep.subr.bf16.mxu0 0
  %608 = vmatpush1.bf16.msra.mxu0 0
  %609 = vmatprep.mubr.bf16.mxu0 0
  %610 = vmatmul.mubr.bf16.gmra.mrb[0].mxu0 %v575
  %v611 = vpop.f32.mrb[0].mxu0
  %v612 = vadd.f32 0.0, %v611
  %v613 = vpop.f32.mrb[0].mxu0
  %v614 = vpop.f32.mrb[0].mxu0
  %v615 = vpop.f32.mrb[0].mxu0
  %616 = vdwg.mxu0
  %v617 = vadd.f32 %v255, %v612
  %v618 = vxor.u32 %v617, 2147483648
  %v619 = vmul.f32 %v618, 1.442695
  %v620 = vpow.pop %v619
  %v621 = vadd.f32 %v620, 1.0
  %v622 = vrcp.pop %v621
  %v623 = vmul.f32 1.0, %v622
  %v624 = vtanh.pop %v617
  %v625 = vmul.f32 %v623, %v563
  %627 = vrot.lane.b32.xlu0 %v624, 64
  %v628 = vpop.permute.xlu0 %627
  %v630 = vmul.f32 %v623, %v628
  %632 = vrot.lane.b32.xlu0 %v630, 32
  %v633 = vpop.permute.xlu0 %632
  %v635 = vadd.f32 %v625, %v633
  %v636 = vtanh.pop %v635
  %638 = vrot.lane.b32.xlu0 %v636, 64
  %v639 = vpop.permute.xlu0 %638
  %v641 = vmul.f32 %v623, %v639
  %v642 = vpack.c.bf16 %v641, %v641
  %644 = vrot.lane.b32.xlu0 %v642, 32
  %v645 = vpop.permute.xlu0 %644
  %v647 = vsel %vm285, %v645, 0
  %649 = vmatprep.subr.bf16.mxu0 0
  %650 = vmatpush1.bf16.msra.mxu0 %v281
  %651 = vmatprep.subr.bf16.mxu0 0
  %652 = vmatpush1.bf16.msra.mxu0 %v282
  %653 = vmatprep.subr.bf16.mxu0 0
  %654 = vmatpush1.bf16.msra.mxu0 0
  %655 = vmatprep.subr.bf16.mxu0 0
  %656 = vmatpush1.bf16.msra.mxu0 0
  %657 = vmatprep.subr.bf16.mxu0 0
  %658 = vmatpush1.bf16.msra.mxu0 0
  %659 = vmatprep.subr.bf16.mxu0 0
  %660 = vmatpush1.bf16.msra.mxu0 0
  %661 = vmatprep.subr.bf16.mxu0 0
  %662 = vmatpush1.bf16.msra.mxu0 0
  %663 = vmatprep.subr.bf16.mxu0 0
  %664 = vmatpush1.bf16.msra.mxu0 0
  %665 = vmatprep.subr.bf16.mxu0 0
  %666 = vmatpush1.bf16.msra.mxu0 0
  %667 = vmatprep.subr.bf16.mxu0 0
  %668 = vmatpush1.bf16.msra.mxu0 0
  %669 = vmatprep.subr.bf16.mxu0 0
  %670 = vmatpush1.bf16.msra.mxu0 0
  %671 = vmatprep.subr.bf16.mxu0 0
  %672 = vmatpush1.bf16.msra.mxu0 0
  %673 = vmatprep.subr.bf16.mxu0 0
  %674 = vmatpush1.bf16.msra.mxu0 0
  %675 = vmatprep.subr.bf16.mxu0 0
  %676 = vmatpush1.bf16.msra.mxu0 0
  %677 = vmatprep.subr.bf16.mxu0 0
  %678 = vmatpush1.bf16.msra.mxu0 0
  %679 = vmatprep.subr.bf16.mxu0 0
  %680 = vmatpush1.bf16.msra.mxu0 0
  %681 = vmatprep.mubr.bf16.mxu0 0
  %682 = vmatmul.mubr.bf16.gmra.mrb[0].mxu0 %v647
  %v683 = vpop.f32.mrb[0].mxu0
  %v684 = vadd.f32 0.0, %v683
  %v685 = vpop.f32.mrb[0].mxu0
  %v686 = vpop.f32.mrb[0].mxu0
  %v687 = vpop.f32.mrb[0].mxu0
  %688 = vdwg.mxu0
  %v689 = vadd.f32 %v258, %v684
  %v690 = vxor.u32 %v689, 2147483648
  %v691 = vmul.f32 %v690, 1.442695
  %v692 = vpow.pop %v691
  %v693 = vadd.f32 %v692, 1.0
  %v694 = vrcp.pop %v693
  %v695 = vmul.f32 1.0, %v694
  %v696 = vtanh.pop %v689
  %v697 = vmul.f32 %v695, %v635
  %699 = vrot.lane.b32.xlu0 %v696, 64
  %v700 = vpop.permute.xlu0 %699
  %v702 = vmul.f32 %v695, %v700
  %704 = vrot.lane.b32.xlu0 %v702, 32
  %v705 = vpop.permute.xlu0 %704
  %v707 = vadd.f32 %v697, %v705
  %v708 = vtanh.pop %v707
  %710 = vrot.lane.b32.xlu0 %v708, 64
  %v711 = vpop.permute.xlu0 %710
  %v713 = vmul.f32 %v695, %v711
  %v714 = vpack.c.bf16 %v713, %v713
  %716 = vrot.lane.b32.xlu0 %v714, 32
  %v717 = vpop.permute.xlu0 %716
  %v719 = vsel %vm285, %v717, 0
  %721 = vmatprep.subr.bf16.mxu0 0
  %722 = vmatpush1.bf16.msra.mxu0 %v281
  %723 = vmatprep.subr.bf16.mxu0 0
  %724 = vmatpush1.bf16.msra.mxu0 %v282
  %725 = vmatprep.subr.bf16.mxu0 0
  %726 = vmatpush1.bf16.msra.mxu0 0
  %727 = vmatprep.subr.bf16.mxu0 0
  %728 = vmatpush1.bf16.msra.mxu0 0
  %729 = vmatprep.subr.bf16.mxu0 0
  %730 = vmatpush1.bf16.msra.mxu0 0
  %731 = vmatprep.subr.bf16.mxu0 0
  %732 = vmatpush1.bf16.msra.mxu0 0
  %733 = vmatprep.subr.bf16.mxu0 0
  %734 = vmatpush1.bf16.msra.mxu0 0
  %735 = vmatprep.subr.bf16.mxu0 0
  %736 = vmatpush1.bf16.msra.mxu0 0
  %737 = vmatprep.subr.bf16.mxu0 0
  %738 = vmatpush1.bf16.msra.mxu0 0
  %739 = vmatprep.subr.bf16.mxu0 0
  %740 = vmatpush1.bf16.msra.mxu0 0
  %741 = vmatprep.subr.bf16.mxu0 0
  %742 = vmatpush1.bf16.msra.mxu0 0
  %743 = vmatprep.subr.bf16.mxu0 0
  %744 = vmatpush1.bf16.msra.mxu0 0
  %745 = vmatprep.subr.bf16.mxu0 0
  %746 = vmatpush1.bf16.msra.mxu0 0
  %747 = vmatprep.subr.bf16.mxu0 0
  %748 = vmatpush1.bf16.msra.mxu0 0
  %749 = vmatprep.subr.bf16.mxu0 0
  %750 = vmatpush1.bf16.msra.mxu0 0
  %751 = vmatprep.subr.bf16.mxu0 0
  %752 = vmatpush1.bf16.msra.mxu0 0
  %753 = vmatprep.mubr.bf16.mxu0 0
  %754 = vmatmul.mubr.bf16.gmra.mrb[0].mxu0 %v719
  %v755 = vpop.f32.mrb[0].mxu0
  %v756 = vadd.f32 0.0, %v755
  %v757 = vpop.f32.mrb[0].mxu0
  %v758 = vpop.f32.mrb[0].mxu0
  %v759 = vpop.f32.mrb[0].mxu0
  %760 = vdwg.mxu0
  %v761 = vadd.f32 %v263, %v756
  %v762 = vxor.u32 %v761, 2147483648
  %v763 = vmul.f32 %v762, 1.442695
  %v764 = vpow.pop %v763
  %v765 = vadd.f32 %v764, 1.0
  %v766 = vrcp.pop %v765
  %v767 = vmul.f32 1.0, %v766
  %v768 = vtanh.pop %v761
  %v769 = vmul.f32 %v767, %v707
  %771 = vrot.lane.b32.xlu0 %v768, 64
  %v772 = vpop.permute.xlu0 %771
  %v774 = vmul.f32 %v767, %v772
  %776 = vrot.lane.b32.xlu0 %v774, 32
  %v777 = vpop.permute.xlu0 %776
  %v779 = vadd.f32 %v769, %v777
  %v780 = vtanh.pop %v779
  %782 = vrot.lane.b32.xlu0 %v780, 64
  %v783 = vpop.permute.xlu0 %782
  %v785 = vmul.f32 %v767, %v783
  %v786 = vpack.c.bf16 %v785, %v785
  %788 = vrot.lane.b32.xlu0 %v786, 32
  %v789 = vpop.permute.xlu0 %788
  %v791 = vsel %vm285, %v789, 0
  %793 = vmatprep.subr.bf16.mxu0 0
  %794 = vmatpush1.bf16.msra.mxu0 %v281
  %795 = vmatprep.subr.bf16.mxu0 0
  %796 = vmatpush1.bf16.msra.mxu0 %v282
  %797 = vmatprep.subr.bf16.mxu0 0
  %798 = vmatpush1.bf16.msra.mxu0 0
  %799 = vmatprep.subr.bf16.mxu0 0
  %800 = vmatpush1.bf16.msra.mxu0 0
  %801 = vmatprep.subr.bf16.mxu0 0
  %802 = vmatpush1.bf16.msra.mxu0 0
  %803 = vmatprep.subr.bf16.mxu0 0
  %804 = vmatpush1.bf16.msra.mxu0 0
  %805 = vmatprep.subr.bf16.mxu0 0
  %806 = vmatpush1.bf16.msra.mxu0 0
  %807 = vmatprep.subr.bf16.mxu0 0
  %808 = vmatpush1.bf16.msra.mxu0 0
  %809 = vmatprep.subr.bf16.mxu0 0
  %810 = vmatpush1.bf16.msra.mxu0 0
  %811 = vmatprep.subr.bf16.mxu0 0
  %812 = vmatpush1.bf16.msra.mxu0 0
  %813 = vmatprep.subr.bf16.mxu0 0
  %814 = vmatpush1.bf16.msra.mxu0 0
  %815 = vmatprep.subr.bf16.mxu0 0
  %816 = vmatpush1.bf16.msra.mxu0 0
  %817 = vmatprep.subr.bf16.mxu0 0
  %818 = vmatpush1.bf16.msra.mxu0 0
  %819 = vmatprep.subr.bf16.mxu0 0
  %820 = vmatpush1.bf16.msra.mxu0 0
  %821 = vmatprep.subr.bf16.mxu0 0
  %822 = vmatpush1.bf16.msra.mxu0 0
  %823 = vmatprep.subr.bf16.mxu0 0
  %824 = vmatpush1.bf16.msra.mxu0 0
  %825 = vmatprep.mubr.bf16.mxu0 0
  %826 = vmatmul.mubr.bf16.gmra.mrb[0].mxu0 %v791
  %v827 = vpop.f32.mrb[0].mxu0
  %v828 = vadd.f32 0.0, %v827
  %v829 = vpop.f32.mrb[0].mxu0
  %v830 = vpop.f32.mrb[0].mxu0
  %v831 = vpop.f32.mrb[0].mxu0
  %832 = vdwg.mxu0
  %v833 = vadd.f32 %v266, %v828
  %v834 = vxor.u32 %v833, 2147483648
  %v835 = vmul.f32 %v834, 1.442695
  %v836 = vpow.pop %v835
  %v837 = vadd.f32 %v836, 1.0
  %v838 = vrcp.pop %v837
  %v839 = vmul.f32 1.0, %v838
  %v840 = vtanh.pop %v833
  %v841 = vmul.f32 %v839, %v779
  %843 = vrot.lane.b32.xlu0 %v840, 64
  %v844 = vpop.permute.xlu0 %843
  %v846 = vmul.f32 %v839, %v844
  %848 = vrot.lane.b32.xlu0 %v846, 32
  %v849 = vpop.permute.xlu0 %848
  %v851 = vadd.f32 %v841, %v849
  %v852 = vtanh.pop %v851
  %854 = vrot.lane.b32.xlu0 %v852, 64
  %v855 = vpop.permute.xlu0 %854
  %v857 = vmul.f32 %v839, %v855
  %v858 = vld [vmem:[%s6] sm:$0xff]
  %v859 = vld [vmem:[%s6 + $0x8] sm:$0xff]
  %v860 = vld [vmem:[%s6 + $0x10] sm:$0xff]
  %v861 = vld [vmem:[%s6 + $0x18] sm:$0xff]
  %v862 = vld [vmem:[#allocation2] sm:$0x1]
  %v864 = vlaneseq
  %v865 = vshrl.u32 %v864, 7
  %v866 = vsub.s32 0, %v865
  %v867 = vrot.slane %v862, %v866
  %870 = vrot.lane.b32.xlu0 %v857, 32
  %v871 = vpop.permute.xlu0 %870
  %v872 = vsel %vm285, %v871, 0
  %874 = vmatprep.subr.mxu0 0.0
  %875 = vmatpush1.msra.mxu0 %v858
  %876 = vmatprep.subr.mxu0 0.0
  %877 = vmatpush1.msra.mxu0 %v859
  %878 = vmatprep.subr.mxu0 0.0
  %879 = vmatpush1.msra.mxu0 %v860
  %880 = vmatprep.subr.mxu0 0.0
  %881 = vmatpush1.msra.mxu0 %v861
  %882 = vmatprep.subr.mxu0 0.0
  %883 = vmatpush1.msra.mxu0 0.0
  %884 = vmatprep.subr.mxu0 0.0
  %885 = vmatpush1.msra.mxu0 0.0
  %886 = vmatprep.subr.mxu0 0.0
  %887 = vmatpush1.msra.mxu0 0.0
  %888 = vmatprep.subr.mxu0 0.0
  %889 = vmatpush1.msra.mxu0 0.0
  %890 = vmatprep.subr.mxu0 0.0
  %891 = vmatpush1.msra.mxu0 0.0
  %892 = vmatprep.subr.mxu0 0.0
  %893 = vmatpush1.msra.mxu0 0.0
  %894 = vmatprep.subr.mxu0 0.0
  %895 = vmatpush1.msra.mxu0 0.0
  %896 = vmatprep.subr.mxu0 0.0
  %897 = vmatpush1.msra.mxu0 0.0
  %898 = vmatprep.subr.mxu0 0.0
  %899 = vmatpush1.msra.mxu0 0.0
  %900 = vmatprep.subr.mxu0 0.0
  %901 = vmatpush1.msra.mxu0 0.0
  %902 = vmatprep.subr.mxu0 0.0
  %903 = vmatpush1.msra.mxu0 0.0
  %904 = vmatprep.subr.mxu0 0.0
  %905 = vmatpush1.msra.mxu0 0.0
  %906 = vmatprep.subr.mxu0 0.0
  %907 = vmatpush1.msra.mxu0 0.0
  %908 = vmatprep.subr.mxu0 0.0
  %909 = vmatpush1.msra.mxu0 0.0
  %910 = vmatprep.subr.mxu0 0.0
  %911 = vmatpush1.msra.mxu0 0.0
  %912 = vmatprep.subr.mxu0 0.0
  %913 = vmatpush1.msra.mxu0 0.0
  %914 = vmatprep.subr.mxu0 0.0
  %915 = vmatpush1.msra.mxu0 0.0
  %916 = vmatprep.subr.mxu0 0.0
  %917 = vmatpush1.msra.mxu0 0.0
  %918 = vmatprep.subr.mxu0 0.0
  %919 = vmatpush1.msra.mxu0 0.0
  %920 = vmatprep.subr.mxu0 0.0
  %921 = vmatpush1.msra.mxu0 0.0
  %922 = vmatprep.subr.mxu0 0.0
  %923 = vmatpush1.msra.mxu0 0.0
  %924 = vmatprep.subr.mxu0 0.0
  %925 = vmatpush1.msra.mxu0 0.0
  %926 = vmatprep.subr.mxu0 0.0
  %927 = vmatpush1.msra.mxu0 0.0
  %928 = vmatprep.subr.mxu0 0.0
  %929 = vmatpush1.msra.mxu0 0.0
  %930 = vmatprep.subr.mxu0 0.0
  %931 = vmatpush1.msra.mxu0 0.0
  %932 = vmatprep.subr.mxu0 0.0
  %933 = vmatpush1.msra.mxu0 0.0
  %934 = vmatprep.subr.mxu0 0.0
  %935 = vmatpush1.msra.mxu0 0.0
  %936 = vmatprep.subr.mxu0 0.0
  %937 = vmatpush1.msra.mxu0 0.0
  %938 = vmatprep.mubr.f32.mxu0 0.0
  %939 = vmatmul.mubr.f32.gmra.mrb[0].mxu0 %v872
  %v940 = vpop.f32.mrb[0].mxu0
  %v941 = vadd.f32 %v867, %v940
  %v942 = vpop.f32.mrb[0].mxu0
  %943 = vdwg.mxu0
  %946 = vrot.lane.b32.xlu0 %v941, 64
  %v947 = vpop.permute.xlu0 %946
  %v949 = vsel %vm285, %v871, %v851
  %vm950 = vcmask 523264
  %v951 = vsel %vm950, %v949, %v947
  %vm952 = vcmask 531456
  %v953 = vsel %vm952, %v951, 0.0
  %954 = vst [vmem:[%s8] sm:$0xff] %v953
  // Predicated region
  $region34: #{autoregressive_rnn_forward.1} parent=0 // pred_check
    _
  $region35: #{autoregressive_rnn_forward.1} parent=0 // pred_check_branch
    %956 = sbr.rel (0) target = $region37
  $region36: #{autoregressive_rnn_forward.1} parent=0 // pred_region
    _
  $region37: #{autoregressive_rnn_forward.1} parent=0 // pred_fallthru
    _
  // Predicated region
  $region38: #{autoregressive_rnn_forward.1} parent=0 // pred_check
    _
  $region39: #{autoregressive_rnn_forward.1} parent=0 // pred_check_branch
    %958 = sbr.rel (0) target = $region41
  $region40: #{autoregressive_rnn_forward.1} parent=0 // pred_region
    _
  $region41: #{autoregressive_rnn_forward.1} parent=0 // pred_fallthru
    _

</llo_original>
